<compile_context>
chip_gen: v7x
topology: tpu7x:2x2x1
jax: 0.10.0
libtpu: 0.0.40
codegen_flags: <defaults>
</compile_context>

<pallas_src>
import functools

import jax
import jax.numpy as jnp
from jax import lax
from jax.experimental import pallas as pl
from jax.experimental.pallas import tpu as pltpu

LN_EPS = 1e-5      # torch.nn.LayerNorm default
_MAX_TB = 8        # bound the static per-row store loop unroll
_TL_CAP = 16384    # positions per L tile (review: 8K-16K sweet spot for small C)


def _patch_embed_kernel(x_ref, gamma_ref, beta_ref, o_ref, *,
                        apply_ln, pack_k, inv_c, eps):
    # x_ref:      (TB, C, TL)   -- channels on sublanes, L on lanes (lane-dense)
    # gamma/beta: (1, C, 1)
    # o_ref:      (TB, TL, C) or, when pack_k > 1, (TB, TL//pack_k, pack_k*C)
    x = x_ref[...]
    if apply_ln:
        xf = x.astype(jnp.float32)
        # Vectorized single-pass stats over the channel (sublane) axis for the
        # whole block; gamma/beta broadcasts hoisted out of any loop.
        s1 = jnp.sum(xf, axis=1, keepdims=True)             # (TB, 1, TL)
        s2 = jnp.sum(xf * xf, axis=1, keepdims=True)        # (TB, 1, TL)
        mean = s1 * inv_c
        var = jnp.maximum(s2 * inv_c - mean * mean, 0.0)    # clamp E[x^2]-E[x]^2
        inv = lax.rsqrt(var + eps)                          # EUP
        y = (xf - mean) * inv * gamma_ref[...] + beta_ref[...]
    else:
        y = x
    # Cast to the output dtype *before* the transpose: halves the vregs pushed
    # through the XLU for sub-32-bit outputs; the stats above stay in f32.
    y = y.astype(o_ref.dtype)
    tb, c, tl = y.shape
    for i in range(tb):                 # static, TB <= _MAX_TB (typically 1)
        yt = y[i].T                     # (TL, C): one XLU transpose per row
        if pack_k > 1:
            # Merge pack_k consecutive positions into one 128-wide lane row so
            # the output stores are unmasked vst (same HBM bytes as (TL, C)).
            yt = yt.reshape(tl // pack_k, pack_k * c)
        o_ref[i] = yt


def _vmem_capacity_bytes():
    """Generation-aware VMEM capacity; conservative (v7x, 64 MiB) on failure."""
    try:
        cap = getattr(pltpu.get_tpu_info(), "vmem_capacity_bytes", None)
        if cap:
            return int(cap)
    except Exception:
        pass
    return 64 * 2**20


def _normalize_tile_l(tl, L):
    """Clamp TL so the BlockSpec (8,128) rules hold: TL == L, or TL % 128 == 0."""
    tl = max(1, min(int(tl), L))
    if tl < L:
        tl = (tl // 128) * 128
        if tl < 128:
            tl = min(128, L)
    return tl


def _choose_tiles(B, C, L, elem_bytes, vmem_cap):
    """Pick (TB, TL) so each HBM-facing block is ~block_budget bytes: big enough
    to sit near the HBM roofline and amortize the ~0.35us per-grid-step cost,
    small enough that double-buffered blocks + f32 temporaries fit VMEM."""
    # 128 MiB parts (v5e/v6e) take ~8 MiB blocks; the 64 MiB v7x stays at 4 MiB.
    block_budget = 8 * 2**20 if vmem_cap >= 96 * 2**20 else 4 * 2**20
    per_pos = C * max(elem_bytes, 4)   # bytes per L position (f32 compute copy)
    tl_budget = max(1, block_budget // per_pos)
    if tl_budget >= L:
        tile_l = L
    else:
        tile_l = _normalize_tile_l(min(_TL_CAP, tl_budget), L)
    # Pack batch rows while the block stays inside the budget (tiny-shape /
    # small-C path); capped so the static per-row store loop stays small.
    tile_b = int(max(1, min(B, _MAX_TB, block_budget // max(1, per_pos * tile_l))))
    return tile_b, tile_l


def _ensure_two_steps(B, L, TB, TL):
    """Guarantee >= 2 grid steps when possible: a 1-step grid would leave one of
    v7x's two TensorCores idle (no-op on v5e/v6e beyond ~0.35us)."""
    if pl.cdiv(B, TB) * pl.cdiv(L, TL) >= 2:
        return TB, TL
    if TB > 1:
        return max(1, (TB + 1) // 2), TL
    if TL == L and L >= 256:
        return TB, _normalize_tile_l((L // 2 // 128) * 128, L)
    return TB, TL


def patch_embed_forward(x_nchw, gamma=None, beta=None, *, eps=LN_EPS,
                        pack_lanes=True, tile_b=None, tile_l=None):
    """x_nchw: (B, C, H, W) -> (B, H*W, C), with optional LayerNorm over C.

    gamma/beta: (C,) LayerNorm affine params, or None for no normalization
    (matches PatchEmbed(norm_layer=None)).
    """
    B, C, H, W = x_nchw.shape
    L = H * W
    x_flat = x_nchw.reshape(B, C, L)          # flatten(2): metadata-only reshape
    apply_ln = gamma is not None

    out_dtype = x_nchw.dtype
    in_bytes = jnp.dtype(x_nchw.dtype).itemsize
    out_bytes = jnp.dtype(out_dtype).itemsize

    vmem_cap = _vmem_capacity_bytes()
    auto_tb, auto_tl = _choose_tiles(B, C, L, max(in_bytes, out_bytes), vmem_cap)
    TB = max(1, min(int(tile_b), B)) if tile_b is not None else auto_tb
    TL = _normalize_tile_l(tile_l, L) if tile_l is not None else auto_tl
    TB, TL = _ensure_two_steps(B, L, TB, TL)

    # Lane-dense output packing factor (k consecutive positions per 128-lane row).
    pack_k = 1
    if pack_lanes and 8 <= C < 128 and 128 % C == 0 and L % (128 // C) == 0:
        pack_k = 128 // C

    if gamma is None:
        gamma = jnp.ones((C,), jnp.float32)
        beta = jnp.zeros((C,), jnp.float32)
    gamma3d = jnp.asarray(gamma, jnp.float32).reshape(1, C, 1)
    beta3d = jnp.asarray(beta, jnp.float32).reshape(1, C, 1)

    grid = (pl.cdiv(B, TB), pl.cdiv(L, TL))

    # Explicit scoped-VMEM limit: double-buffered in/out blocks + f32 compute
    # copies + headroom, with a generation-aware hard cap.
    in_block = TB * C * TL * in_bytes
    out_block = TB * C * TL * out_bytes
    temps = 3 * TB * C * TL * 4
    hard_cap = (100 * 2**20) if vmem_cap >= 96 * 2**20 else (52 * 2**20)
    vmem_limit = int(min(hard_cap, max(32 * 2**20,
                                       2 * (in_block + out_block) + temps + 8 * 2**20)))

    def _call(pk):
        if pk > 1:
            out_shape = jax.ShapeDtypeStruct((B, L // pk, pk * C), out_dtype)
            out_spec = pl.BlockSpec((TB, TL // pk, pk * C), lambda b, l: (b, l, 0))
        else:
            out_shape = jax.ShapeDtypeStruct((B, L, C), out_dtype)
            out_spec = pl.BlockSpec((TB, TL, C), lambda b, l: (b, l, 0))
        kernel = functools.partial(_patch_embed_kernel, apply_ln=apply_ln,
                                   pack_k=pk, inv_c=1.0 / C, eps=eps)
        out = pl.pallas_call(
            kernel,
            out_shape=out_shape,
            grid_spec=pltpu.PrefetchScalarGridSpec(
                num_scalar_prefetch=0,
                grid=grid,
                in_specs=[
                    pl.BlockSpec((TB, C, TL), lambda b, l: (b, 0, l)),
                    pl.BlockSpec((1, C, 1), lambda b, l: (0, 0, 0)),
                    pl.BlockSpec((1, C, 1), lambda b, l: (0, 0, 0)),
                ],
                out_specs=out_spec),
            compiler_params=pltpu.CompilerParams(
                dimension_semantics=("parallel", "parallel"),
                vmem_limit_bytes=vmem_limit),
        )(x_flat, gamma3d, beta3d)
        if pk > 1:
            out = jax.block_until_ready(out)   # surface lowering/run issues here
            out = out.reshape(B, L, C)         # same contiguous HBM bytes: free
        return out

    if pack_k > 1:
        try:
            return _call(pack_k)
        except Exception:
            # Toolchain could not lower the in-register lane-merge reshape on
            # this shape; fall back to the plain (masked-store) output path.
            pass
    return _call(1)


def _reference(x_nchw, gamma, beta, eps=LN_EPS):
    B, C, H, W = x_nchw.shape
    xt = jnp.transpose(x_nchw.reshape(B, C, H * W), (0, 2, 1)).astype(jnp.float32)
    if gamma is None:
        return xt.astype(x_nchw.dtype)
    mean = jnp.mean(xt, axis=-1, keepdims=True)
    var = jnp.mean((xt - mean) ** 2, axis=-1, keepdims=True)
    y = (xt - mean) * lax.rsqrt(var + eps) * gamma + beta
    return y.astype(x_nchw.dtype)


if __name__ == "__main__":
    key = jax.random.PRNGKey(0)
    k1, k2, k3 = jax.random.split(key, 3)

    # 1) Small module-consistent shape: B=2, embed_dim C=32, H=W=8 -> L=64.
    B, C, H, W = 2, 32, 8, 8
    x = jax.random.normal(k1, (B, C, H, W), dtype=jnp.float32)
    gamma = 1.0 + 0.01 * jnp.arange(C, dtype=jnp.float32)
    beta = 0.01 * jnp.arange(C, dtype=jnp.float32)
    ref = _reference(x, gamma, beta)
    out = jax.block_until_ready(patch_embed_forward(x, gamma, beta))
    assert out.shape == (B, H * W, C)
    assert jnp.allclose(out, ref, atol=5e-5, rtol=5e-5), "mismatch (LN path)"

    # 2) norm_layer=None path (pure flatten + transpose).
    out_nn = jax.block_until_ready(patch_embed_forward(x, None, None))
    assert jnp.allclose(out_nn, _reference(x, None, None)), "mismatch (no-norm)"

    # 3) Forced L-tiling with a non-dividing tail (TL=128 over L=320).
    B2, C2, H2, W2 = 1, 32, 16, 20
    x2 = jax.random.normal(k2, (B2, C2, H2, W2), dtype=jnp.float32)
    out2 = jax.block_until_ready(patch_embed_forward(x2, gamma, beta, tile_l=128))
    ref2 = _reference(x2, gamma, beta)
    assert out2.shape == (B2, H2 * W2, C2)
    assert jnp.allclose(out2, ref2, atol=5e-5, rtol=5e-5), "mismatch (tiled path)"

    # 4) Non-packable embed dim (128 % 96 != 0): plain output path.
    B3, C3, H3, W3 = 1, 96, 8, 8
    x3 = jax.random.normal(k3, (B3, C3, H3, W3), dtype=jnp.float32)
    g3 = jnp.full((C3,), 1.5, jnp.float32)
    b3 = jnp.full((C3,), -0.25, jnp.float32)
    out3 = jax.block_until_ready(patch_embed_forward(x3, g3, b3))
    ref3 = _reference(x3, g3, b3)
    assert out3.shape == (B3, H3 * W3, C3)
    assert jnp.allclose(out3, ref3, atol=5e-5, rtol=5e-5), "mismatch (C=96 path)"

    print("KERNEL_OK")
</pallas_src>

<mosaic_0001>
module attributes {stable_mosaic.version = 11 : i64} {
  func.func @_patch_embed_kernel(%arg0: i32, %arg1: i32, %arg2: memref<1x32x64xf32, #tpu.memory_space<vmem>>, %arg3: memref<1x32x1xf32, #tpu.memory_space<vmem>>, %arg4: memref<1x32x1xf32, #tpu.memory_space<vmem>>, %arg5: memref<1x16x128xf32, #tpu.memory_space<vmem>>) attributes {dimension_semantics = [#tpu.dimension_semantics<parallel>, #tpu.dimension_semantics<parallel>], iteration_bounds = array<i64: 2, 1>, scalar_prefetch = 0 : i64, scratch_operands = 0 : i64, tpu.core_type = #tpu.core_type<tc>, window_params = [{transform_indices = @transform_0, window_bounds = array<i64: 1, 32, 64>}, {pipeline_mode = #tpu.pipeline_mode<synchronous>, transform_indices = @transform_1, window_bounds = array<i64: 1, 32, 1>}, {pipeline_mode = #tpu.pipeline_mode<synchronous>, transform_indices = @transform_2, window_bounds = array<i64: 1, 32, 1>}, {transform_indices = @transform_3, window_bounds = array<i64: 1, 16, 128>}]} {
    %c0 = arith.constant 0 : index
    %c0_0 = arith.constant 0 : index
    %c0_1 = arith.constant 0 : index
    %0 = vector.load %arg2[%c0, %c0_0, %c0_1] : memref<1x32x64xf32, #tpu.memory_space<vmem>>, vector<1x32x64xf32>
    %cst = arith.constant dense<0.000000e+00> : vector<1x64xf32>
    %1 = vector.multi_reduction <add>, %0, %cst [1] : vector<1x32x64xf32> to vector<1x64xf32>
    %2 = vector.shape_cast %1 : vector<1x64xf32> to vector<1x1x64xf32>
    %3 = arith.mulf %0, %0 : vector<1x32x64xf32>
    %cst_2 = arith.constant dense<0.000000e+00> : vector<1x64xf32>
    %4 = vector.multi_reduction <add>, %3, %cst_2 [1] : vector<1x32x64xf32> to vector<1x64xf32>
    %5 = vector.shape_cast %4 : vector<1x64xf32> to vector<1x1x64xf32>
    %cst_3 = arith.constant 3.125000e-02 : f32
    %6 = vector.broadcast %cst_3 : f32 to vector<1x1x64xf32>
    %7 = arith.mulf %2, %6 : vector<1x1x64xf32>
    %cst_4 = arith.constant 3.125000e-02 : f32
    %8 = vector.broadcast %cst_4 : f32 to vector<1x1x64xf32>
    %9 = arith.mulf %5, %8 : vector<1x1x64xf32>
    %10 = arith.mulf %7, %7 : vector<1x1x64xf32>
    %11 = arith.subf %9, %10 : vector<1x1x64xf32>
    %cst_5 = arith.constant 0.000000e+00 : f32
    %12 = vector.broadcast %cst_5 : f32 to vector<1x1x64xf32>
    %13 = arith.maximumf %11, %12 : vector<1x1x64xf32>
    %cst_6 = arith.constant 9.99999974E-6 : f32
    %14 = vector.broadcast %cst_6 : f32 to vector<1x1x64xf32>
    %15 = arith.addf %13, %14 : vector<1x1x64xf32>
    %16 = math.rsqrt %15 : vector<1x1x64xf32>
    %17 = vector.broadcast %7 : vector<1x1x64xf32> to vector<1x32x64xf32>
    %18 = arith.subf %0, %17 : vector<1x32x64xf32>
    %19 = vector.broadcast %16 : vector<1x1x64xf32> to vector<1x32x64xf32>
    %20 = arith.mulf %18, %19 : vector<1x32x64xf32>
    %c0_7 = arith.constant 0 : index
    %c0_8 = arith.constant 0 : index
    %c0_9 = arith.constant 0 : index
    %21 = vector.load %arg3[%c0_7, %c0_8, %c0_9] : memref<1x32x1xf32, #tpu.memory_space<vmem>>, vector<1x32x1xf32>
    %22 = vector.broadcast %21 : vector<1x32x1xf32> to vector<1x32x64xf32>
    %23 = arith.mulf %20, %22 : vector<1x32x64xf32>
    %c0_10 = arith.constant 0 : index
    %c0_11 = arith.constant 0 : index
    %c0_12 = arith.constant 0 : index
    %24 = vector.load %arg4[%c0_10, %c0_11, %c0_12] : memref<1x32x1xf32, #tpu.memory_space<vmem>>, vector<1x32x1xf32>
    %25 = vector.broadcast %24 : vector<1x32x1xf32> to vector<1x32x64xf32>
    %26 = arith.addf %23, %25 : vector<1x32x64xf32>
    %27 = vector.shape_cast %26 : vector<1x32x64xf32> to vector<32x64xf32>
    %28 = tpu.transpose %27, [1, 0] : vector<32x64xf32> -> vector<64x32xf32>
    %29 = vector.shape_cast %28 : vector<64x32xf32> to vector<16x128xf32>
    %c0_13 = arith.constant 0 : index
    %c0_14 = arith.constant 0 : index
    %c0_15 = arith.constant 0 : index
    %30 = vector.load %arg5[%c0_13, %c0_14, %c0_15] : memref<1x16x128xf32, #tpu.memory_space<vmem>>, vector<1x16x128xf32>
    %31 = vector.shape_cast %30 : vector<1x16x128xf32> to vector<16x128xf32>
    %32 = vector.shape_cast %29 : vector<16x128xf32> to vector<1x16x128xf32>
    tpu.vector_store %arg5[%c0_13, %c0_14, %c0_15], %32 {strides = array<i32>} : memref<1x16x128xf32, #tpu.memory_space<vmem>>, vector<1x16x128xf32>,
    return
  }
  func.func @transform_0(%arg0: i32, %arg1: i32) -> (i32, i32, i32) {
    %c0_i32 = arith.constant 0 : i32
    %c0_i32_0 = arith.constant 0 : i32
    return %arg0, %c0_i32, %arg1 : i32, i32, i32
  }
  func.func @transform_1(%arg0: i32, %arg1: i32) -> (i32, i32, i32) {
    %c0_i32 = arith.constant 0 : i32
    %c0_i32_0 = arith.constant 0 : i32
    %c0_i32_1 = arith.constant 0 : i32
    %c0_i32_2 = arith.constant 0 : i32
    return %c0_i32, %c0_i32_0, %c0_i32_1 : i32, i32, i32
  }
  func.func @transform_2(%arg0: i32, %arg1: i32) -> (i32, i32, i32) {
    %c0_i32 = arith.constant 0 : i32
    %c0_i32_0 = arith.constant 0 : i32
    %c0_i32_1 = arith.constant 0 : i32
    %c0_i32_2 = arith.constant 0 : i32
    return %c0_i32, %c0_i32_0, %c0_i32_1 : i32, i32, i32
  }
  func.func @transform_3(%arg0: i32, %arg1: i32) -> (i32, i32, i32) {
    %c0_i32 = arith.constant 0 : i32
    %c0_i32_0 = arith.constant 0 : i32
    return %arg0, %arg1, %c0_i32 : i32, i32, i32
  }
}

module attributes {stable_mosaic.version = 11 : i64} {
  func.func @_patch_embed_kernel(%arg0: i32, %arg1: i32, %arg2: memref<1x32x64xf32, #tpu.memory_space<vmem>>, %arg3: memref<1x32x1xf32, #tpu.memory_space<vmem>>, %arg4: memref<1x32x1xf32, #tpu.memory_space<vmem>>, %arg5: memref<1x64x32xf32, #tpu.memory_space<vmem>>) attributes {dimension_semantics = [#tpu.dimension_semantics<parallel>, #tpu.dimension_semantics<parallel>], iteration_bounds = array<i64: 2, 1>, scalar_prefetch = 0 : i64, scratch_operands = 0 : i64, tpu.core_type = #tpu.core_type<tc>, window_params = [{transform_indices = @transform_0, window_bounds = array<i64: 1, 32, 64>}, {pipeline_mode = #tpu.pipeline_mode<synchronous>, transform_indices = @transform_1, window_bounds = array<i64: 1, 32, 1>}, {pipeline_mode = #tpu.pipeline_mode<synchronous>, transform_indices = @transform_2, window_bounds = array<i64: 1, 32, 1>}, {transform_indices = @transform_3, window_bounds = array<i64: 1, 64, 32>}]} {
    %c0 = arith.constant 0 : index
    %c0_0 = arith.constant 0 : index
    %c0_1 = arith.constant 0 : index
    %0 = vector.load %arg2[%c0, %c0_0, %c0_1] : memref<1x32x64xf32, #tpu.memory_space<vmem>>, vector<1x32x64xf32>
    %cst = arith.constant dense<0.000000e+00> : vector<1x64xf32>
    %1 = vector.multi_reduction <add>, %0, %cst [1] : vector<1x32x64xf32> to vector<1x64xf32>
    %2 = vector.shape_cast %1 : vector<1x64xf32> to vector<1x1x64xf32>
    %3 = arith.mulf %0, %0 : vector<1x32x64xf32>
    %cst_2 = arith.constant dense<0.000000e+00> : vector<1x64xf32>
    %4 = vector.multi_reduction <add>, %3, %cst_2 [1] : vector<1x32x64xf32> to vector<1x64xf32>
    %5 = vector.shape_cast %4 : vector<1x64xf32> to vector<1x1x64xf32>
    %cst_3 = arith.constant 3.125000e-02 : f32
    %6 = vector.broadcast %cst_3 : f32 to vector<1x1x64xf32>
    %7 = arith.mulf %2, %6 : vector<1x1x64xf32>
    %cst_4 = arith.constant 3.125000e-02 : f32
    %8 = vector.broadcast %cst_4 : f32 to vector<1x1x64xf32>
    %9 = arith.mulf %5, %8 : vector<1x1x64xf32>
    %10 = arith.mulf %7, %7 : vector<1x1x64xf32>
    %11 = arith.subf %9, %10 : vector<1x1x64xf32>
    %cst_5 = arith.constant 0.000000e+00 : f32
    %12 = vector.broadcast %cst_5 : f32 to vector<1x1x64xf32>
    %13 = arith.maximumf %11, %12 : vector<1x1x64xf32>
    %cst_6 = arith.constant 9.99999974E-6 : f32
    %14 = vector.broadcast %cst_6 : f32 to vector<1x1x64xf32>
    %15 = arith.addf %13, %14 : vector<1x1x64xf32>
    %16 = math.rsqrt %15 : vector<1x1x64xf32>
    %17 = vector.broadcast %7 : vector<1x1x64xf32> to vector<1x32x64xf32>
    %18 = arith.subf %0, %17 : vector<1x32x64xf32>
    %19 = vector.broadcast %16 : vector<1x1x64xf32> to vector<1x32x64xf32>
    %20 = arith.mulf %18, %19 : vector<1x32x64xf32>
    %c0_7 = arith.constant 0 : index
    %c0_8 = arith.constant 0 : index
    %c0_9 = arith.constant 0 : index
    %21 = vector.load %arg3[%c0_7, %c0_8, %c0_9] : memref<1x32x1xf32, #tpu.memory_space<vmem>>, vector<1x32x1xf32>
    %22 = vector.broadcast %21 : vector<1x32x1xf32> to vector<1x32x64xf32>
    %23 = arith.mulf %20, %22 : vector<1x32x64xf32>
    %c0_10 = arith.constant 0 : index
    %c0_11 = arith.constant 0 : index
    %c0_12 = arith.constant 0 : index
    %24 = vector.load %arg4[%c0_10, %c0_11, %c0_12] : memref<1x32x1xf32, #tpu.memory_space<vmem>>, vector<1x32x1xf32>
    %25 = vector.broadcast %24 : vector<1x32x1xf32> to vector<1x32x64xf32>
    %26 = arith.addf %23, %25 : vector<1x32x64xf32>
    %27 = vector.shape_cast %26 : vector<1x32x64xf32> to vector<32x64xf32>
    %28 = tpu.transpose %27, [1, 0] : vector<32x64xf32> -> vector<64x32xf32>
    %c0_13 = arith.constant 0 : index
    %c0_14 = arith.constant 0 : index
    %c0_15 = arith.constant 0 : index
    %29 = vector.load %arg5[%c0_13, %c0_14, %c0_15] : memref<1x64x32xf32, #tpu.memory_space<vmem>>, vector<1x64x32xf32>
    %30 = vector.shape_cast %29 : vector<1x64x32xf32> to vector<64x32xf32>
    %31 = vector.shape_cast %28 : vector<64x32xf32> to vector<1x64x32xf32>
    tpu.vector_store %arg5[%c0_13, %c0_14, %c0_15], %31 {strides = array<i32>} : memref<1x64x32xf32, #tpu.memory_space<vmem>>, vector<1x64x32xf32>,
    return
  }
  func.func @transform_0(%arg0: i32, %arg1: i32) -> (i32, i32, i32) {
    %c0_i32 = arith.constant 0 : i32
    %c0_i32_0 = arith.constant 0 : i32
    return %arg0, %c0_i32, %arg1 : i32, i32, i32
  }
  func.func @transform_1(%arg0: i32, %arg1: i32) -> (i32, i32, i32) {
    %c0_i32 = arith.constant 0 : i32
    %c0_i32_0 = arith.constant 0 : i32
    %c0_i32_1 = arith.constant 0 : i32
    %c0_i32_2 = arith.constant 0 : i32
    return %c0_i32, %c0_i32_0, %c0_i32_1 : i32, i32, i32
  }
  func.func @transform_2(%arg0: i32, %arg1: i32) -> (i32, i32, i32) {
    %c0_i32 = arith.constant 0 : i32
    %c0_i32_0 = arith.constant 0 : i32
    %c0_i32_1 = arith.constant 0 : i32
    %c0_i32_2 = arith.constant 0 : i32
    return %c0_i32, %c0_i32_0, %c0_i32_1 : i32, i32, i32
  }
  func.func @transform_3(%arg0: i32, %arg1: i32) -> (i32, i32, i32) {
    %c0_i32 = arith.constant 0 : i32
    %c0_i32_0 = arith.constant 0 : i32
    return %arg0, %arg1, %c0_i32 : i32, i32, i32
  }
}

</mosaic_0001>

<llo_original>
// kernel: tpu_custom_call.1
$region0: #{tpu_custom_call.1}
  #allocation0 [shape = 'u32[]', space=smem, size = 0x4, offset = 0x4, fixed_abs, tag = 'smem constant byte address 0x4 - core index']
  #allocation1 [shape = 'u32[144,128]{1,0:T(1,128)}', space=vmem, size = 0x12000, scoped, tag = 'internal scratch']
  %s0 = inlined_call_operand.vmem [shape: f32[2,32,64], index: 0, kind: input, shape index: {}]
  %s1 = inlined_call_operand.vmem [shape: f32[1,32,1], index: 1, kind: input, shape index: {}]
  %s2 = inlined_call_operand.vmem [shape: f32[1,32,1], index: 2, kind: input, shape index: {}]
  %s3 = inlined_call_operand.vmem [shape: f32[2,64,32], index: 3, kind: output, shape index: {}]
  %s4 = sld [smem:[#allocation0]]
  $region45: #{tpu_custom_call.1} parent=0
    _
  %s6 = ssub.s32 1, %s4
  %s7 = scalar_select 0, %s6, %s4
  loop: start=0, step=1, limit=4
  $region2: #{tpu_custom_call.1} parent=0 // loop_pre_header
    _
  $region3: #{tpu_custom_call.1} parent=0 // loop_header
    %s9 = sphi 0, %s13
    %p10 = scmp.ge.s32.totalorder %s9, 4
    %s16 = sphi 0, %s28
    %s17 = sphi 0, %s24
    %s18 = sphi 0, %s16
    %s19 = sphi 0, %s17
    %s20 = sphi 0, %s18
    %s21 = sphi 0, %s19
    %s33 = sphi 0, %s35
    %s36 = sphi 0, %s33
    %s37 = sphi 0, %s36
    %s53 = sphi 0, %s37
    %s57 = sphi 0, %s57
    %s59 = sphi 0, %s57
    %s60 = sphi 0, %s59
    %s74 = sphi 0, %s60
    %s78 = sphi 0, %s78
    %s80 = sphi 0, %s78
    %s81 = sphi 0, %s80
    %s95 = sphi 0, %s81
    %s103 = sphi 0, %s105
    %s106 = sphi 0, %s103
    %s107 = sphi 0, %s106
    %s123 = sphi 0, %s107
  $region4: #{tpu_custom_call.1} parent=0 // loop_header_branch
    %12 = sbr.rel (%p10) target = $region8
  $region5: #{tpu_custom_call.1} parent=0 // loop_body
    %s14 = ssub.s32 %s9, 1
    %s15 = ssub.s32 %s9, 2
    %s22 = sadd.s32 1, %s17
    %p23 = scmp.ge.s32.totalorder %s22, 1
    %s24 = scalar_select %p23, 0, %s22
    %s25 = sadd.s32 1, %s16
    %s26 = scalar_select %p23, %s25, %s16
    %p27 = scmp.ge.s32.totalorder %s26, 2
    %s28 = scalar_select %p27, 0, %s26
    %s29 = ssub.s32 %s16, %s28
    %s30 = ssub.s32 %s17, %s24
    %s31 = sor.u32 %s29, %s30
    %p32 = scmp.eq.s32.totalorder %s31, 0
    %s34 = sadd.s32 %s33, 1
    %s35 = scalar_select %p32, %s33, %s34
    %p38 = pneg %p32
    %p39 = scmp.eq.s32.totalorder %s9, 1
    %p40 = por %p38, %p39
    %p41 = scmp.ne.s32.totalorder %s33, %s36
    %p42 = scmp.eq.s32.totalorder %s9, 0
    %p43 = por %p41, %p42
    %p44 = scmp.ne.s32.totalorder %s33, %s36
    %p45 = scmp.eq.s32.totalorder %s14, 1
    %p46 = por %p44, %p45
    %p47 = scmp.ne.s32.totalorder %s36, %s37
    %p48 = scmp.eq.s32.totalorder %s14, 0
    %p49 = por %p47, %p48
    %p50 = scmp.ne.s32.totalorder %s36, %s37
    %p51 = scmp.eq.s32.totalorder %s15, 1
    %p52 = por %p50, %p51
    %p54 = scmp.ne.s32.totalorder %s37, %s53
    %p55 = scmp.eq.s32.totalorder %s15, 0
    %p56 = por %p54, %p55
    %s58 = sadd.s32 %s57, 1
    %p61 = scmp.eq.s32.totalorder %s9, 1
    %p62 = scmp.ne.s32.totalorder %s57, %s59
    %p63 = scmp.eq.s32.totalorder %s9, 0
    %p64 = por %p62, %p63
    %p65 = scmp.ne.s32.totalorder %s57, %s59
    %p66 = scmp.eq.s32.totalorder %s14, 1
    %p67 = por %p65, %p66
    %p68 = scmp.ne.s32.totalorder %s59, %s60
    %p69 = scmp.eq.s32.totalorder %s14, 0
    %p70 = por %p68, %p69
    %p71 = scmp.ne.s32.totalorder %s59, %s60
    %p72 = scmp.eq.s32.totalorder %s15, 1
    %p73 = por %p71, %p72
    %p75 = scmp.ne.s32.totalorder %s60, %s74
    %p76 = scmp.eq.s32.totalorder %s15, 0
    %p77 = por %p75, %p76
    %s79 = sadd.s32 %s78, 1
    %p82 = scmp.eq.s32.totalorder %s9, 1
    %p83 = scmp.ne.s32.totalorder %s78, %s80
    %p84 = scmp.eq.s32.totalorder %s9, 0
    %p85 = por %p83, %p84
    %p86 = scmp.ne.s32.totalorder %s78, %s80
    %p87 = scmp.eq.s32.totalorder %s14, 1
    %p88 = por %p86, %p87
    %p89 = scmp.ne.s32.totalorder %s80, %s81
    %p90 = scmp.eq.s32.totalorder %s14, 0
    %p91 = por %p89, %p90
    %p92 = scmp.ne.s32.totalorder %s80, %s81
    %p93 = scmp.eq.s32.totalorder %s15, 1
    %p94 = por %p92, %p93
    %p96 = scmp.ne.s32.totalorder %s81, %s95
    %p97 = scmp.eq.s32.totalorder %s15, 0
    %p98 = por %p96, %p97
    %s99 = ssub.s32 %s16, %s28
    %s100 = ssub.s32 %s17, %s24
    %s101 = sor.u32 %s99, %s100
    %p102 = scmp.eq.s32.totalorder %s101, 0
    %s104 = sadd.s32 %s103, 1
    %s105 = scalar_select %p102, %s103, %s104
    %p108 = pneg %p102
    %p109 = scmp.eq.s32.totalorder %s9, 1
    %p110 = por %p108, %p109
    %p111 = scmp.ne.s32.totalorder %s103, %s106
    %p112 = scmp.eq.s32.totalorder %s9, 0
    %p113 = por %p111, %p112
    %p114 = scmp.ne.s32.totalorder %s103, %s106
    %p115 = scmp.eq.s32.totalorder %s14, 1
    %p116 = por %p114, %p115
    %p117 = scmp.ne.s32.totalorder %s106, %s107
    %p118 = scmp.eq.s32.totalorder %s14, 0
    %p119 = por %p117, %p118
    %p120 = scmp.ne.s32.totalorder %s106, %s107
    %p121 = scmp.eq.s32.totalorder %s15, 1
    %p122 = por %p120, %p121
    %p124 = scmp.ne.s32.totalorder %s107, %s123
    %p125 = scmp.eq.s32.totalorder %s15, 0
    %p126 = por %p124, %p125
    %p127 = scmp.le.s32.totalorder 1, %s9
    %p128 = scmp.lt.s32.totalorder %s9, 3
    %p129 = pnand %p127, %p128
    %p130 = pneg %p129
    // Predicated region
    $region9: #{tpu_custom_call.1} parent=5 // pred_check
      _
    $region10: #{tpu_custom_call.1} parent=5 // pred_check_branch
      %132 = sbr.rel (%p129) target = $region12
    $region11: #{tpu_custom_call.1} parent=5 // pred_region
      %s133 = ssub.s32 %s9, 1
      // Predicated region
      $region13: #{tpu_custom_call.1} parent=11 // pred_check
        %p134 = pneg %p70
      $region14: #{tpu_custom_call.1} parent=11 // pred_check_branch
        %136 = sbr.rel (%p134) target = $region16
      $region15: #{tpu_custom_call.1} parent=11 // pred_region
        _
      $region16: #{tpu_custom_call.1} parent=11 // pred_fallthru
        _
      // Predicated region
      $region17: #{tpu_custom_call.1} parent=11 // pred_check
        %p137 = pneg %p91
      $region18: #{tpu_custom_call.1} parent=11 // pred_check_branch
        %139 = sbr.rel (%p137) target = $region20
      $region19: #{tpu_custom_call.1} parent=11 // pred_region
        _
      $region20: #{tpu_custom_call.1} parent=11 // pred_fallthru
        _
    $region12: #{tpu_custom_call.1} parent=5 // pred_fallthru
      _
    %p140 = scmp.lt.s32.totalorder %s9, 2
    // Predicated region
    $region21: #{tpu_custom_call.1} parent=5 // pred_check
      %p141 = pneg %p140
    $region22: #{tpu_custom_call.1} parent=5 // pred_check_branch
      %143 = sbr.rel (%p141) target = $region24
    $region23: #{tpu_custom_call.1} parent=5 // pred_region
      // Predicated region
      $region25: #{tpu_custom_call.1} parent=23 // pred_check
        %p144 = pneg %p43
      $region26: #{tpu_custom_call.1} parent=23 // pred_check_branch
        %146 = sbr.rel (%p144) target = $region28
      $region27: #{tpu_custom_call.1} parent=23 // pred_region
        %p147 = scmp.lt.s32.totalorder %s16, 1
        %s148 = scalar_select %p147, %s16, 1
        %p149 = scmp.lt.s32.totalorder %s17, 0
        %s150 = scalar_select %p149, %s17, 0
        %s151 = smul.addr %s148, 4
        %s152 = sadd.s32 %s150, %s151
        %s153 = smul.addr %s152, 8
        %s154 = scalar_lea.vmem %s0, %s153
      $region28: #{tpu_custom_call.1} parent=23 // pred_fallthru
        _
    $region24: #{tpu_custom_call.1} parent=5 // pred_fallthru
      _
    %p155 = scmp.le.s32.totalorder 1, %s9
    %p156 = scmp.lt.s32.totalorder %s9, 3
    %p157 = pnand %p155, %p156
    %p158 = pneg %p157
    // Predicated region
    $region29: #{tpu_custom_call.1} parent=5 // pred_check
      _
    $region30: #{tpu_custom_call.1} parent=5 // pred_check_branch
      %160 = sbr.rel (%p157) target = $region32
    $region31: #{tpu_custom_call.1} parent=5 // pred_region
      %s161 = ssub.s32 %s9, 1
      %p162 = scmp.lt.s32.totalorder %s18, 1
      %s163 = scalar_select %p162, %s18, 1
      %p164 = scmp.lt.s32.totalorder %s19, 0
      %s165 = scalar_select %p164, %s19, 0
      %s166 = smul.addr %s163, 4
      %s167 = sadd.s32 %s165, %s166
      %s168 = smul.addr %s167, 8
      %s169 = scalar_lea.vmem %s0, %s168
      %p170 = pneg %p49
      %p171 = pneg %p46
      %p172 = pneg %p70
      %p173 = pneg %p67
      %p174 = pneg %p91
      %p175 = pneg %p88
      %p176 = pneg %p119
      %p177 = pneg %p116
      %s178 = smul.u32 8, %s19
      %p179 = scmp.lt.s32.totalorder %s18, 1
      %s180 = scalar_select %p179, %s18, 1
      %p181 = scmp.lt.s32.totalorder %s178, 7
      %s182 = scalar_select %p181, %s178, 7
      %s183 = smul.addr %s180, 8
      %s184 = sadd.s32 %s182, %s183
      %s185 = smul.addr %s184, 8
      %s186 = scalar_lea.vmem %s3, %s185
      %p187 = scmp.lt.s32.totalorder %s18, 1
      %s188 = scalar_select %p187, %s18, 1
      %p189 = scmp.lt.s32.totalorder %s19, 0
      %s190 = scalar_select %p189, %s19, 0
      %s191 = smul.addr %s188, 4
      %s192 = sadd.s32 %s190, %s191
      %s193 = smul.addr %s192, 8
      %s194 = scalar_lea.vmem %s0, %s193
      %s195 = smul.u32 8, %s19
      %p196 = scmp.lt.s32.totalorder %s18, 1
      %s197 = scalar_select %p196, %s18, 1
      %p198 = scmp.lt.s32.totalorder %s195, 7
      %s199 = scalar_select %p198, %s195, 7
      %s200 = smul.addr %s197, 8
      %s201 = sadd.s32 %s199, %s200
      %s202 = smul.addr %s201, 8
      %s203 = scalar_lea.vmem %s3, %s202
      %s204 = smul.u32 8, %s19
      %v205 = vld [vmem:[%s194] sm:$0xff]
      %v206 = vld [vmem:[%s194 + $0x8] sm:$0xff]
      %v207 = vld [vmem:[%s194 + $0x10] sm:$0xff]
      %v208 = vld [vmem:[%s194 + $0x18] sm:$0xff]
      %vm209 = vcmask 523264
      %v210 = vsel %vm209, %v205, 0.0
      %v211 = vsel %vm209, %v206, 0.0
      %v212 = vadd.f32 %v210, %v211
      %v213 = vsel %vm209, %v207, 0.0
      %v214 = vadd.f32 %v212, %v213
      %v215 = vsel %vm209, %v208, 0.0
      %v216 = vadd.f32 %v214, %v215
      %v217 = vrot.slane %v216, 4
      %v218 = vadd.f32 %v216, %v217
      %v219 = vrot.slane %v218, 2
      %v220 = vadd.f32 %v218, %v219
      %v221 = vrot.slane %v220, 1
      %v222 = vadd.f32 %v220, %v221
      %v223 = vmul.f32 %v205, %v205
      %v224 = vmul.f32 %v206, %v206
      %v225 = vmul.f32 %v207, %v207
      %v226 = vmul.f32 %v208, %v208
      %v227 = vsel %vm209, %v223, 0.0
      %v228 = vsel %vm209, %v224, 0.0
      %v229 = vadd.f32 %v227, %v228
      %v230 = vsel %vm209, %v225, 0.0
      %v231 = vadd.f32 %v229, %v230
      %v232 = vsel %vm209, %v226, 0.0
      %v233 = vadd.f32 %v231, %v232
      %v234 = vrot.slane %v233, 4
      %v235 = vadd.f32 %v233, %v234
      %v236 = vrot.slane %v235, 2
      %v237 = vadd.f32 %v235, %v236
      %v238 = vrot.slane %v237, 1
      %v239 = vadd.f32 %v237, %v238
      %v240 = vmul.f32 %v222, 0.03125
      %v241 = vmul.f32 %v239, 0.03125
      %v242 = vmul.f32 %v240, %v240
      %v243 = vsub.f32 %v241, %v242
      %v244 = vmax.f32 %v243, 0.0
      %v245 = vadd.f32 %v244, 1e-05
      %v246 = vrsqrt.pop %v245
      %v247 = vsub.f32 %v205, %v240
      %v248 = vsub.f32 %v206, %v240
      %v249 = vsub.f32 %v207, %v240
      %v250 = vsub.f32 %v208, %v240
      %v251 = vmul.f32 %v247, %v246
      %v252 = vmul.f32 %v248, %v246
      %v253 = vmul.f32 %v249, %v246
      %v254 = vmul.f32 %v250, %v246
      %v255 = vld [vmem:[%s1] sm:$0xff]
      %v256 = vld [vmem:[%s1 + $0x8] sm:$0xff]
      %v257 = vld [vmem:[%s1 + $0x10] sm:$0xff]
      %v258 = vld [vmem:[%s1 + $0x18] sm:$0xff]
      %260 = vset.pattern.permute.xlu0 0
      %261 = vperm.xlu0 %260, %v255
      %v262 = vpop.permute.xlu0 %261
      %265 = vset.pattern.permute.xlu0 0
      %266 = vperm.xlu0 %265, %v256
      %v267 = vpop.permute.xlu0 %266
      %270 = vset.pattern.permute.xlu0 0
      %271 = vperm.xlu0 %270, %v257
      %v272 = vpop.permute.xlu0 %271
      %275 = vset.pattern.permute.xlu0 0
      %276 = vperm.xlu0 %275, %v258
      %v277 = vpop.permute.xlu0 %276
      %v279 = vmul.f32 %v251, %v262
      %v280 = vmul.f32 %v252, %v267
      %v281 = vmul.f32 %v253, %v272
      %v282 = vmul.f32 %v254, %v277
      %v283 = vld [vmem:[%s2] sm:$0xff]
      %v284 = vld [vmem:[%s2 + $0x8] sm:$0xff]
      %v285 = vld [vmem:[%s2 + $0x10] sm:$0xff]
      %v286 = vld [vmem:[%s2 + $0x18] sm:$0xff]
      %288 = vset.pattern.permute.xlu0 0
      %289 = vperm.xlu0 %288, %v283
      %v290 = vpop.permute.xlu0 %289
      %293 = vset.pattern.permute.xlu0 0
      %294 = vperm.xlu0 %293, %v284
      %v295 = vpop.permute.xlu0 %294
      %298 = vset.pattern.permute.xlu0 0
      %299 = vperm.xlu0 %298, %v285
      %v300 = vpop.permute.xlu0 %299
      %303 = vset.pattern.permute.xlu0 0
      %304 = vperm.xlu0 %303, %v286
      %v305 = vpop.permute.xlu0 %304
      %v307 = vadd.f32 %v279, %v290
      %v308 = vadd.f32 %v280, %v295
      %v309 = vadd.f32 %v281, %v300
      %v310 = vadd.f32 %v282, %v305
      %311 = vxpose.xlu0.b32.start [1/16] %v307, 128
      %312 = vxpose.xlu0.b32.cont [2/16] %v308, 128
      %313 = vxpose.xlu0.b32.cont [3/16] %v309, 128
      %314 = vxpose.xlu0.b32.cont [4/16] %v310, 128
      %315 = vxpose.xlu0.b32.cont [5/16] 0.0, 128
      %316 = vxpose.xlu0.b32.cont [6/16] 0.0, 128
      %317 = vxpose.xlu0.b32.cont [7/16] 0.0, 128
      %318 = vxpose.xlu0.b32.cont [8/16] 0.0, 128
      %319 = vxpose.xlu0.b32.cont [9/16] 0.0, 128
      %320 = vxpose.xlu0.b32.cont [10/16] 0.0, 128
      %321 = vxpose.xlu0.b32.cont [11/16] 0.0, 128
      %322 = vxpose.xlu0.b32.cont [12/16] 0.0, 128
      %323 = vxpose.xlu0.b32.cont [13/16] 0.0, 128
      %324 = vxpose.xlu0.b32.cont [14/16] 0.0, 128
      %325 = vxpose.xlu0.b32.cont [15/16] 0.0, 128
      %326 = vxpose.xlu0.b32.end [16/16] 0.0, 128
      %v327 = vpop.trf.xlu0
      %v328 = vpop.trf.xlu0
      %v329 = vpop.trf.xlu0
      %v330 = vpop.trf.xlu0
      %v331 = vpop.trf.xlu0
      %v332 = vpop.trf.xlu0
      %v333 = vpop.trf.xlu0
      %v334 = vpop.trf.xlu0
      %v335 = vpop.trf.xlu0
      %v336 = vpop.trf.xlu0
      %v337 = vpop.trf.xlu0
      %v338 = vpop.trf.xlu0
      %v339 = vpop.trf.xlu0
      %v340 = vpop.trf.xlu0
      %v341 = vpop.trf.xlu0
      %v342 = vpop.trf.xlu0
      %vm343 = vcmask 261120
      %344 = vst.msk [vmem:[%s203] sm:$0xff] %vm343, %v327
      %345 = vst.msk [vmem:[%s203 + $0x8] sm:$0xff] %vm343, %v328
      %346 = vst.msk [vmem:[%s203 + $0x10] sm:$0xff] %vm343, %v329
      %347 = vst.msk [vmem:[%s203 + $0x18] sm:$0xff] %vm343, %v330
      %348 = vst.msk [vmem:[%s203 + $0x20] sm:$0xff] %vm343, %v331
      %349 = vst.msk [vmem:[%s203 + $0x28] sm:$0xff] %vm343, %v332
      %350 = vst.msk [vmem:[%s203 + $0x30] sm:$0xff] %vm343, %v333
      %351 = vst.msk [vmem:[%s203 + $0x38] sm:$0xff] %vm343, %v334
      %s352 = smul.u32 8, %s19
      %p353 = scmp.lt.s32.totalorder %s18, 1
      %s354 = scalar_select %p353, %s18, 1
      %p355 = scmp.lt.s32.totalorder %s352, 7
      %s356 = scalar_select %p355, %s352, 7
      %s357 = smul.addr %s354, 8
      %s358 = sadd.s32 %s356, %s357
      %s359 = smul.addr %s358, 8
      %s360 = scalar_lea.vmem %s3, %s359
      // Predicated region
      $region33: #{tpu_custom_call.1} parent=31 // pred_check
        %p361 = pneg %p116
      $region34: #{tpu_custom_call.1} parent=31 // pred_check_branch
        %363 = sbr.rel (%p361) target = $region36
      $region35: #{tpu_custom_call.1} parent=31 // pred_region
        %s364 = smul.u32 8, %s19
      $region36: #{tpu_custom_call.1} parent=31 // pred_fallthru
        _
    $region32: #{tpu_custom_call.1} parent=5 // pred_fallthru
      _
    %p365 = scmp.le.s32.totalorder 2, %s9
    // Predicated region
    $region37: #{tpu_custom_call.1} parent=5 // pred_check
      %p366 = pneg %p365
    $region38: #{tpu_custom_call.1} parent=5 // pred_check_branch
      %368 = sbr.rel (%p366) target = $region40
    $region39: #{tpu_custom_call.1} parent=5 // pred_region
      %s369 = ssub.s32 %s9, 2
      // Predicated region
      $region41: #{tpu_custom_call.1} parent=39 // pred_check
        %p370 = pneg %p122
      $region42: #{tpu_custom_call.1} parent=39 // pred_check_branch
        %372 = sbr.rel (%p370) target = $region44
      $region43: #{tpu_custom_call.1} parent=39 // pred_region
        %s373 = smul.u32 8, %s21
        %p374 = scmp.lt.s32.totalorder %s20, 1
        %s375 = scalar_select %p374, %s20, 1
        %p376 = scmp.lt.s32.totalorder %s373, 7
        %s377 = scalar_select %p376, %s373, 7
        %s378 = smul.addr %s375, 8
        %s379 = sadd.s32 %s377, %s378
        %s380 = smul.addr %s379, 8
        %s381 = scalar_lea.vmem %s3, %s380
      $region44: #{tpu_custom_call.1} parent=39 // pred_fallthru
        _
    $region40: #{tpu_custom_call.1} parent=5 // pred_fallthru
      _
  $region6: #{tpu_custom_call.1} parent=0 // loop_footer
    %s13 = sadd.s32 1, %s9
  $region7: #{tpu_custom_call.1} parent=0 // loop_footer_branch
    %8 = sbr.rel target = $region3
  $region8: #{tpu_custom_call.1} parent=0 // loop_exit
    _

</llo_original>
